<compile_context>
chip_gen: v5e
topology: v5e:2x2
jax: 0.10.0
libtpu: 0.0.40
codegen_flags: <defaults>
</compile_context>

<pallas_src>
import functools
import math

import jax
import jax.numpy as jnp
from jax.experimental import pallas as pl
from jax.experimental.pallas import tpu as pltpu

_LANE = 512          # lane-dense block width
_ROW_ALIGN = 16      # block-row granularity (valid for f32 and bf16 sublane packing)
_CHUNK_ROWS = 512    # rows per in-kernel compute chunk (f32 temporaries ~1 MiB each)
_LN2 = math.log(2.0)


def _cdiv(a, b):
    return -(-a // b)


def _round_up(a, m):
    return _cdiv(a, m) * m


def _round_down(a, m):
    return (a // m) * m


def _smoothed(t, label_smoothing):
    if label_smoothing > 0.0:
        # t*(1-ls) + (1-t)*ls  ==  t*(1-2*ls) + ls   (single FMA, constants folded)
        return t * jnp.float32(1.0 - 2.0 * label_smoothing) + jnp.float32(label_smoothing)
    return t


def _bce_reference(logits, targets, label_smoothing):
    """Plain-XLA fallback (and test reference): stable BCE-with-logits, mean reduced."""
    x = logits.astype(jnp.float32)
    t = _smoothed(targets.astype(jnp.float32), label_smoothing)
    loss = jnp.maximum(x, 0.0) - x * t + jnp.log1p(jnp.exp(-jnp.abs(x)))
    return jnp.mean(loss)


def _bce_kernel(x_ref, t_ref, out_ref, acc_ref, *,
                label_smoothing, inv_total, chunk_rows, valid_rows_last):
    i = pl.program_id(0)
    steps = pl.num_programs(0)
    tile_rows, lane = x_ref.shape           # static block shape

    @pl.when(i == 0)
    def _init():
        acc_ref[...] = jnp.zeros_like(acc_ref)

    def chunk_accumulate(start, n_valid):
        # Static slice -> zero-cost view; load a multiple-of-8-row slab and upcast.
        n_load = min(_round_up(n_valid, 8), tile_rows - start)
        x = x_ref[pl.ds(start, n_load), :].astype(jnp.float32)
        t = _smoothed(t_ref[pl.ds(start, n_load), :].astype(jnp.float32), label_smoothing)
        # Numerically stable BCE-with-logits (same as torch.nn.BCEWithLogitsLoss).
        loss = jnp.maximum(x, 0.0) - x * t + jnp.log1p(jnp.exp(-jnp.abs(x)))
        if n_valid < n_load:
            # Only the single ragged-boundary chunk ever pays for this mask (static threshold);
            # garbage (possibly NaN/Inf) rows are discarded by the select.
            rid = jax.lax.broadcasted_iota(jnp.int32, (n_load, lane), 0)
            loss = jnp.where(rid < n_valid, loss, jnp.float32(0.0))
        # Sublane-group vector accumulation (pure VPU adds); the cross-lane reduce
        # happens once, in the epilogue.
        acc_ref[...] += jnp.sum(loss.reshape(n_load // 8, 8, lane), axis=0)

    def accumulate(valid_rows):              # valid_rows is a static Python int
        for start in range(0, valid_rows, chunk_rows):
            chunk_accumulate(start, min(chunk_rows, valid_rows - start))

    if valid_rows_last == tile_rows:         # rows divisible by tile_rows: uniform blocks
        accumulate(tile_rows)
    else:
        @pl.when(i < steps - 1)
        def _full_block():
            accumulate(tile_rows)

        @pl.when(i == steps - 1)
        def _ragged_block():
            accumulate(valid_rows_last)

    @pl.when(i == steps - 1)
    def _finalize():
        # Single cross-lane/sublane reduce + mean scaling, once per call.
        out_ref[0, 0] = jnp.sum(acc_ref[...]) * jnp.float32(inv_total)


def bce_with_logits_loss(logits, targets, *, label_smoothing=0.0, reduction='mean',
                         lane_width=_LANE, block_bytes=8 * 1024 * 1024,
                         min_pallas_elements=1 << 16):
    """Mean-reduced BCEWithLogitsLoss with label smoothing via a Pallas TPU kernel."""
    # TODO(synk): reduction='sum'/'none' and nn.BCEWithLogitsLoss weight/pos_weight args
    #             are not implemented (module default is reduction='mean', no weights).
    assert 0.0 <= label_smoothing < 1.0
    assert reduction == 'mean'
    assert logits.shape == targets.shape

    total = int(math.prod(logits.shape))
    rows_needed = _cdiv(max(total, 1), lane_width)

    # Tiny inputs: the fused pure-XLA elementwise+reduce beats kernel launch + reshape.
    if total < max(min_pallas_elements, 1) or rows_needed < _ROW_ALIGN:
        return _bce_reference(logits, targets, label_smoothing)

    item_x = jnp.dtype(logits.dtype).itemsize
    item_t = jnp.dtype(targets.dtype).itemsize

    # Pad only to lane alignment (< lane_width zero elements, only when strictly needed).
    rem = total % lane_width
    pad = (lane_width - rem) if rem else 0
    x = logits.reshape(-1)
    t = targets.reshape(-1)
    if pad:
        x = jnp.pad(x, (0, pad))
        t = jnp.pad(t, (0, pad))
    rows = (total + pad) // lane_width
    x = x.reshape(rows, lane_width)
    t = t.reshape(rows, lane_width)

    # DMA block rows from a bytes-per-input-per-buffer budget; never taller than the array
    # (so the only ragged block is the trailing one).
    itemsize = max(item_x, item_t)
    max_block_rows = max(_ROW_ALIGN,
                         _round_down(block_bytes // (lane_width * itemsize), _ROW_ALIGN))
    tile_rows = min(max_block_rows, _round_down(rows, _ROW_ALIGN))
    steps = _cdiv(rows, tile_rows)
    valid_rows_last = rows - (steps - 1) * tile_rows       # in 1..tile_rows, static
    chunk_rows = min(_CHUNK_ROWS, tile_rows)

    kernel = functools.partial(
        _bce_kernel,
        label_smoothing=float(label_smoothing),
        inv_total=1.0 / float(total),                      # reciprocal computed in float64
        chunk_rows=chunk_rows,
        valid_rows_last=valid_rows_last,
    )

    # VMEM budget: 2 inputs x 2 pipeline buffers x block + accumulator + f32 chunk
    # temporaries.  Cap <=48 MiB keeps headroom under v7x's 64 MiB physical VMEM; the
    # 32 MiB floor clears v5e's 16 MiB scoped default.
    resident = (2 * tile_rows * lane_width * (item_x + item_t)
                + 8 * lane_width * 4
                + 8 * chunk_rows * lane_width * 4)
    vmem_limit_bytes = int(min(48 * 1024 * 1024,
                               max(32 * 1024 * 1024, resident + (4 << 20))))

    out = pl.pallas_call(
        kernel,
        out_shape=jax.ShapeDtypeStruct((1, 1), jnp.float32),
        grid_spec=pltpu.PrefetchScalarGridSpec(
            num_scalar_prefetch=0,
            grid=(steps,),
            in_specs=[
                pl.BlockSpec((tile_rows, lane_width), lambda i: (i, 0)),
                pl.BlockSpec((tile_rows, lane_width), lambda i: (i, 0)),
            ],
            out_specs=pl.BlockSpec((1, 1), lambda i: (0, 0), memory_space=pltpu.SMEM),
            scratch_shapes=[pltpu.VMEM((8, lane_width), jnp.float32)],
        ),
        compiler_params=pltpu.CompilerParams(
            # TODO(synk): CORE_PARALLEL row split for v7x's second TensorCore.
            dimension_semantics=("arbitrary",),
            vmem_limit_bytes=vmem_limit_bytes,
        ),
    )(x, t)

    loss = out[0, 0]
    if pad:
        # Each zero-padded element contributed exactly ln(2) to the kernel's sum.
        loss = loss - jnp.float32(pad * _LN2 / total)
    return loss


if __name__ == "__main__":
    key = jax.random.PRNGKey(0)
    k1, k2, k3, k4, k5, k6 = jax.random.split(key, 6)

    # Check 1: f32, non-lane-aligned total -> lane-pad ln(2) correction, multi-step grid,
    # ragged last block with an in-kernel row mask, label smoothing.
    ls = 0.1
    x1 = jax.random.normal(k1, (32, 300), dtype=jnp.float32)
    t1 = (jax.random.uniform(k2, (32, 300)) > 0.5).astype(jnp.float32)
    loss1 = jax.block_until_ready(
        bce_with_logits_loss(x1, t1, label_smoothing=ls, min_pallas_elements=0))
    ref1 = _bce_reference(x1, t1, ls)
    assert jnp.allclose(loss1, ref1, rtol=1e-5, atol=1e-5), (loss1, ref1)

    # Check 2: bf16 inputs (half HBM traffic), 3-D shape, lane-aligned, single full block.
    x2 = jax.random.normal(k3, (4, 16, 128), dtype=jnp.bfloat16)
    t2 = (jax.random.uniform(k4, (4, 16, 128)) > 0.5).astype(jnp.bfloat16)
    loss2 = jax.block_until_ready(bce_with_logits_loss(x2, t2, min_pallas_elements=0))
    ref2 = _bce_reference(x2, t2, 0.0)
    assert jnp.allclose(loss2, ref2, rtol=1e-5, atol=1e-5), (loss2, ref2)

    # Check 3: f32, multi-chunk inner loop + ragged (8-aligned, unmasked) last block.
    x3 = jax.random.normal(k5, (512, 600), dtype=jnp.float32)
    t3 = (jax.random.uniform(k6, (512, 600)) > 0.5).astype(jnp.float32)
    loss3 = jax.block_until_ready(
        bce_with_logits_loss(x3, t3, label_smoothing=0.2, min_pallas_elements=0))
    ref3 = _bce_reference(x3, t3, 0.2)
    assert jnp.allclose(loss3, ref3, rtol=1e-5, atol=1e-5), (loss3, ref3)

    # Check 4: tiny input routes through the plain-jnp fallback (default threshold).
    x4 = jax.random.normal(k1, (16, 100), dtype=jnp.float32)
    t4 = (jax.random.uniform(k2, (16, 100)) > 0.5).astype(jnp.float32)
    loss4 = jax.block_until_ready(bce_with_logits_loss(x4, t4, label_smoothing=ls))
    ref4 = _bce_reference(x4, t4, ls)
    assert jnp.allclose(loss4, ref4, rtol=1e-6, atol=1e-6), (loss4, ref4)

    print("KERNEL_OK")
</pallas_src>

<mosaic_0001>
module attributes {stable_mosaic.version = 11 : i64} {
  func.func @_bce_kernel(%arg0: i32, %arg1: memref<16x512xf32, #tpu.memory_space<vmem>>, %arg2: memref<16x512xf32, #tpu.memory_space<vmem>>, %arg3: memref<1x1xf32, #tpu.memory_space<smem>>, %arg4: memref<8x512xf32, #tpu.memory_space<vmem>>) attributes {dimension_semantics = [#tpu.dimension_semantics<arbitrary>], iteration_bounds = array<i64: 2>, scalar_prefetch = 0 : i64, scratch_operands = 1 : i64, tpu.core_type = #tpu.core_type<tc>, window_params = [{transform_indices = @transform_0, window_bounds = array<i64: 16, 512>}, {transform_indices = @transform_1, window_bounds = array<i64: 16, 512>}, {transform_indices = @transform_2, window_bounds = array<i64: 1, 1>}]} {
    %c0_i32 = arith.constant 0 : i32
    %0 = arith.cmpi eq, %arg0, %c0_i32 : i32
    %1 = arith.extui %0 : i1 to i32
    %c0_i32_0 = arith.constant 0 : i32
    %2 = arith.cmpi ne, %1, %c0_i32_0 : i32
    scf.if %2 {
      %cst = arith.constant 0.000000e+00 : f32
      %12 = vector.broadcast %cst : f32 to vector<8x512xf32>
      %c0 = arith.constant 0 : index
      %c0_6 = arith.constant 0 : index
      %13 = vector.load %arg4[%c0, %c0_6] : memref<8x512xf32, #tpu.memory_space<vmem>>, vector<8x512xf32>
      tpu.vector_store %arg4[%c0, %c0_6], %12 {strides = array<i32>} : memref<8x512xf32, #tpu.memory_space<vmem>>, vector<8x512xf32>,
    } else {
    }
    %c1_i32 = arith.constant 1 : i32
    %3 = arith.cmpi slt, %arg0, %c1_i32 : i32
    %4 = arith.extui %3 : i1 to i32
    %c0_i32_1 = arith.constant 0 : i32
    %5 = arith.cmpi ne, %4, %c0_i32_1 : i32
    scf.if %5 {
      %c0 = arith.constant 0 : index
      %c0_6 = arith.constant 0 : index
      %12 = vector.load %arg1[%c0, %c0_6] : memref<16x512xf32, #tpu.memory_space<vmem>>, vector<16x512xf32>
      %c0_7 = arith.constant 0 : index
      %c0_8 = arith.constant 0 : index
      %13 = vector.load %arg2[%c0_7, %c0_8] : memref<16x512xf32, #tpu.memory_space<vmem>>, vector<16x512xf32>
      %cst = arith.constant 8.000000e-01 : f32
      %14 = vector.broadcast %cst : f32 to vector<16x512xf32>
      %15 = arith.mulf %13, %14 : vector<16x512xf32>
      %cst_9 = arith.constant 1.000000e-01 : f32
      %16 = vector.broadcast %cst_9 : f32 to vector<16x512xf32>
      %17 = arith.addf %15, %16 : vector<16x512xf32>
      %cst_10 = arith.constant 0.000000e+00 : f32
      %18 = vector.broadcast %cst_10 : f32 to vector<16x512xf32>
      %19 = arith.maximumf %12, %18 : vector<16x512xf32>
      %20 = arith.mulf %12, %17 : vector<16x512xf32>
      %21 = arith.subf %19, %20 : vector<16x512xf32>
      %22 = math.absf %12 : vector<16x512xf32>
      %cst_11 = arith.constant 0.000000e+00 : f32
      %23 = vector.broadcast %cst_11 : f32 to vector<16x512xf32>
      %24 = arith.subf %23, %22 : vector<16x512xf32>
      %25 = math.exp %24 : vector<16x512xf32>
      %26 = math.log1p %25 : vector<16x512xf32>
      %27 = arith.addf %21, %26 : vector<16x512xf32>
      %c0_12 = arith.constant 0 : index
      %c0_13 = arith.constant 0 : index
      %28 = vector.load %arg4[%c0_12, %c0_13] : memref<8x512xf32, #tpu.memory_space<vmem>>, vector<8x512xf32>
      %29 = vector.shape_cast %27 : vector<16x512xf32> to vector<2x8x512xf32>
      %cst_14 = arith.constant dense<0.000000e+00> : vector<8x512xf32>
      %30 = vector.multi_reduction <add>, %29, %cst_14 [0] : vector<2x8x512xf32> to vector<8x512xf32>
      %31 = arith.addf %28, %30 : vector<8x512xf32>
      %c0_15 = arith.constant 0 : index
      %c0_16 = arith.constant 0 : index
      %32 = vector.load %arg4[%c0_15, %c0_16] : memref<8x512xf32, #tpu.memory_space<vmem>>, vector<8x512xf32>
      tpu.vector_store %arg4[%c0_15, %c0_16], %31 {strides = array<i32>} : memref<8x512xf32, #tpu.memory_space<vmem>>, vector<8x512xf32>,
    } else {
    }
    %c1_i32_2 = arith.constant 1 : i32
    %6 = arith.cmpi eq, %arg0, %c1_i32_2 : i32
    %7 = arith.extui %6 : i1 to i32
    %c0_i32_3 = arith.constant 0 : i32
    %8 = arith.cmpi ne, %7, %c0_i32_3 : i32
    scf.if %8 {
      %c0 = arith.constant 0 : index
      %c0_6 = arith.constant 0 : index
      %12 = vector.load %arg1[%c0, %c0_6] : memref<16x512xf32, #tpu.memory_space<vmem>>, vector<8x512xf32>
      %c0_7 = arith.constant 0 : index
      %c0_8 = arith.constant 0 : index
      %13 = vector.load %arg2[%c0_7, %c0_8] : memref<16x512xf32, #tpu.memory_space<vmem>>, vector<8x512xf32>
      %cst = arith.constant 8.000000e-01 : f32
      %14 = vector.broadcast %cst : f32 to vector<8x512xf32>
      %15 = arith.mulf %13, %14 : vector<8x512xf32>
      %cst_9 = arith.constant 1.000000e-01 : f32
      %16 = vector.broadcast %cst_9 : f32 to vector<8x512xf32>
      %17 = arith.addf %15, %16 : vector<8x512xf32>
      %cst_10 = arith.constant 0.000000e+00 : f32
      %18 = vector.broadcast %cst_10 : f32 to vector<8x512xf32>
      %19 = arith.maximumf %12, %18 : vector<8x512xf32>
      %20 = arith.mulf %12, %17 : vector<8x512xf32>
      %21 = arith.subf %19, %20 : vector<8x512xf32>
      %22 = math.absf %12 : vector<8x512xf32>
      %cst_11 = arith.constant 0.000000e+00 : f32
      %23 = vector.broadcast %cst_11 : f32 to vector<8x512xf32>
      %24 = arith.subf %23, %22 : vector<8x512xf32>
      %25 = math.exp %24 : vector<8x512xf32>
      %26 = math.log1p %25 : vector<8x512xf32>
      %27 = arith.addf %21, %26 : vector<8x512xf32>
      %28 = tpu.iota {dimensions = array<i32: 0>} : vector<8x512xi32>
      %c3_i32 = arith.constant 3 : i32
      %29 = vector.broadcast %c3_i32 : i32 to vector<8x512xi32>
      %30 = arith.cmpi slt, %28, %29 : vector<8x512xi32>
      %cst_12 = arith.constant 0.000000e+00 : f32
      %31 = vector.broadcast %cst_12 : f32 to vector<8x512xf32>
      %32 = arith.select %30, %27, %31 : vector<8x512xi1>, vector<8x512xf32>
      %c0_13 = arith.constant 0 : index
      %c0_14 = arith.constant 0 : index
      %33 = vector.load %arg4[%c0_13, %c0_14] : memref<8x512xf32, #tpu.memory_space<vmem>>, vector<8x512xf32>
      %34 = vector.shape_cast %32 : vector<8x512xf32> to vector<1x8x512xf32>
      %cst_15 = arith.constant dense<0.000000e+00> : vector<8x512xf32>
      %35 = vector.multi_reduction <add>, %34, %cst_15 [0] : vector<1x8x512xf32> to vector<8x512xf32>
      %36 = arith.addf %33, %35 : vector<8x512xf32>
      %c0_16 = arith.constant 0 : index
      %c0_17 = arith.constant 0 : index
      %37 = vector.load %arg4[%c0_16, %c0_17] : memref<8x512xf32, #tpu.memory_space<vmem>>, vector<8x512xf32>
      tpu.vector_store %arg4[%c0_16, %c0_17], %36 {strides = array<i32>} : memref<8x512xf32, #tpu.memory_space<vmem>>, vector<8x512xf32>,
    } else {
    }
    %c1_i32_4 = arith.constant 1 : i32
    %9 = arith.cmpi eq, %arg0, %c1_i32_4 : i32
    %10 = arith.extui %9 : i1 to i32
    %c0_i32_5 = arith.constant 0 : i32
    %11 = arith.cmpi ne, %10, %c0_i32_5 : i32
    scf.if %11 {
      %c0 = arith.constant 0 : index
      %c0_6 = arith.constant 0 : index
      %12 = vector.load %arg4[%c0, %c0_6] : memref<8x512xf32, #tpu.memory_space<vmem>>, vector<8x512xf32>
      %13 = vector.shape_cast %12 : vector<8x512xf32> to vector<1x8x512xf32>
      %cst = arith.constant dense<0.000000e+00> : vector<1xf32>
      %14 = vector.multi_reduction <add>, %13, %cst [1, 2] : vector<1x8x512xf32> to vector<1xf32>
      %15 = vector.shape_cast %14 : vector<1xf32> to vector<1x1x1xf32>
      %16 = vector.extract %15[0, 0, 0] : f32 from vector<1x1x1xf32>
      %cst_7 = arith.constant 1.04166669E-4 : f32
      %17 = arith.mulf %16, %cst_7 : f32
      %c0_8 = arith.constant 0 : index
      %c0_9 = arith.constant 0 : index
      %18 = memref.load %arg3[%c0_8, %c0_9] : memref<1x1xf32, #tpu.memory_space<smem>>
      memref.store %17, %arg3[%c0_8, %c0_9] : memref<1x1xf32, #tpu.memory_space<smem>>
    } else {
    }
    return
  }
  func.func @transform_0(%arg0: i32) -> (i32, i32) {
    %c0_i32 = arith.constant 0 : i32
    %c0_i32_0 = arith.constant 0 : i32
    return %arg0, %c0_i32 : i32, i32
  }
  func.func @transform_1(%arg0: i32) -> (i32, i32) {
    %c0_i32 = arith.constant 0 : i32
    %c0_i32_0 = arith.constant 0 : i32
    return %arg0, %c0_i32 : i32, i32
  }
  func.func @transform_2(%arg0: i32) -> (i32, i32) {
    %c0_i32 = arith.constant 0 : i32
    %c0_i32_0 = arith.constant 0 : i32
    %c0_i32_1 = arith.constant 0 : i32
    return %c0_i32, %c0_i32_0 : i32, i32
  }
}

</mosaic_0001>

<llo_original>
// kernel: tpu_custom_call.1
$region0: #{tpu_custom_call.1}
  #allocation0 [shape = 'u32[]', space=smem, size = 0x4, offset = 0x4, fixed_abs, tag = 'smem constant byte address 0x4 - core index']
  #allocation1 [shape = 'u32[72,128]{1,0:T(1,128)}', space=vmem, size = 0x9000, scoped, tag = 'internal scratch']
  #allocation2 [shape = 'f32[8,512]{1,0:T(8,128)}', space=vmem, size = 0x4000, scoped, tag = 'scratch operand']
  %s0 = inlined_call_operand.hbm [shape: f32[19,512], index: 0, kind: input, shape index: {}]
  %s1 = inlined_call_operand.hbm [shape: f32[19,512], index: 1, kind: input, shape index: {}]
  %s2 = inlined_call_operand.hbm [shape: f32[1,1], index: 2, kind: output, shape index: {}]
  %s3 = sld [smem:[#allocation0]]
  $region61: #{tpu_custom_call.1} parent=0
    _
  %s5 = ssub.s32 1, %s3
  %s6 = scalar_select 0, %s5, %s3
  $region1: #{tpu_custom_call.1} parent=0
    #allocation3 [shape = 'u8[65536]{0}', space=vmem, size = 0x10000, scoped, tag = 'input window, operand 0']
    #allocation4 [shape = 's32[2]{0}', space=sflag, size = 0x8, scoped, tag = 'scoped memory for tpu_custom_call.1']
    #allocation5 [shape = 's32[2]{0}', space=sflag, size = 0x8, scoped, tag = 'scoped memory for tpu_custom_call.1']
    #allocation6 [shape = 'u8[65536]{0}', space=vmem, size = 0x10000, scoped, tag = 'input window, operand 1']
    #allocation7 [shape = 's32[2]{0}', space=sflag, size = 0x8, scoped, tag = 'scoped memory for tpu_custom_call.1']
    #allocation8 [shape = 'u8[512]{0}', space=smem, size = 0x200, scoped, tag = 'output window, operand 0, single buffered']
    %7 = vsyncpa [#allocation4], 0
    %s8 = scalar_lea.sflag [#allocation4], 1
    %9 = vsyncpa %s8, 0
    %10 = vsyncpa [#allocation7], 0
    %s11 = scalar_lea.sflag [#allocation7], 1
    %12 = vsyncpa %s11, 0
    %13 = vsyncpa [#allocation5], 0
    loop: start=0, step=1, limit=4
    $region2: #{tpu_custom_call.1} parent=1 // loop_pre_header
      _
    $region3: #{tpu_custom_call.1} parent=1 // loop_header
      %s15 = sphi 0, %s19
      %p16 = scmp.ge.s32.totalorder %s15, 4
      %s25 = sphi 0, %s27
      %s28 = sphi 0, %s25
      %s29 = sphi 0, %s28
      %s45 = sphi 0, %s29
      %s51 = sphi 0, %s53
      %s54 = sphi 0, %s51
      %s55 = sphi 0, %s54
      %s71 = sphi 0, %s55
      %s75 = sphi 0, %s75
      %s77 = sphi 0, %s75
      %s78 = sphi 0, %s77
      %s92 = sphi 0, %s78
    $region4: #{tpu_custom_call.1} parent=1 // loop_header_branch
      %18 = sbr.rel (%p16) target = $region8
    $region5: #{tpu_custom_call.1} parent=1 // loop_body
      %s20 = ssub.s32 %s15, 1
      %s21 = ssub.s32 %s15, 2
      %s22 = sadd.s32 %s15, 1
      %s23 = ssub.s32 %s15, %s22
      %p24 = scmp.eq.s32.totalorder %s23, 0
      %s26 = sadd.s32 %s25, 1
      %s27 = scalar_select %p24, %s25, %s26
      %p30 = pneg %p24
      %p31 = scmp.eq.s32.totalorder %s15, 1
      %p32 = por %p30, %p31
      %p33 = scmp.ne.s32.totalorder %s25, %s28
      %p34 = scmp.eq.s32.totalorder %s15, 0
      %p35 = por %p33, %p34
      %p36 = scmp.ne.s32.totalorder %s25, %s28
      %p37 = scmp.eq.s32.totalorder %s20, 1
      %p38 = por %p36, %p37
      %p39 = scmp.ne.s32.totalorder %s28, %s29
      %p40 = scmp.eq.s32.totalorder %s20, 0
      %p41 = por %p39, %p40
      %p42 = scmp.ne.s32.totalorder %s28, %s29
      %p43 = scmp.eq.s32.totalorder %s21, 1
      %p44 = por %p42, %p43
      %p46 = scmp.ne.s32.totalorder %s29, %s45
      %p47 = scmp.eq.s32.totalorder %s21, 0
      %p48 = por %p46, %p47
      %s49 = ssub.s32 %s15, %s22
      %p50 = scmp.eq.s32.totalorder %s49, 0
      %s52 = sadd.s32 %s51, 1
      %s53 = scalar_select %p50, %s51, %s52
      %p56 = pneg %p50
      %p57 = scmp.eq.s32.totalorder %s15, 1
      %p58 = por %p56, %p57
      %p59 = scmp.ne.s32.totalorder %s51, %s54
      %p60 = scmp.eq.s32.totalorder %s15, 0
      %p61 = por %p59, %p60
      %p62 = scmp.ne.s32.totalorder %s51, %s54
      %p63 = scmp.eq.s32.totalorder %s20, 1
      %p64 = por %p62, %p63
      %p65 = scmp.ne.s32.totalorder %s54, %s55
      %p66 = scmp.eq.s32.totalorder %s20, 0
      %p67 = por %p65, %p66
      %p68 = scmp.ne.s32.totalorder %s54, %s55
      %p69 = scmp.eq.s32.totalorder %s21, 1
      %p70 = por %p68, %p69
      %p72 = scmp.ne.s32.totalorder %s55, %s71
      %p73 = scmp.eq.s32.totalorder %s21, 0
      %p74 = por %p72, %p73
      %s76 = sadd.s32 %s75, 1
      %p79 = scmp.eq.s32.totalorder %s15, 1
      %p80 = scmp.ne.s32.totalorder %s75, %s77
      %p81 = scmp.eq.s32.totalorder %s15, 0
      %p82 = por %p80, %p81
      %p83 = scmp.ne.s32.totalorder %s75, %s77
      %p84 = scmp.eq.s32.totalorder %s20, 1
      %p85 = por %p83, %p84
      %p86 = scmp.ne.s32.totalorder %s77, %s78
      %p87 = scmp.eq.s32.totalorder %s20, 0
      %p88 = por %p86, %p87
      %p89 = scmp.ne.s32.totalorder %s77, %s78
      %p90 = scmp.eq.s32.totalorder %s21, 1
      %p91 = por %p89, %p90
      %p93 = scmp.ne.s32.totalorder %s78, %s92
      %p94 = scmp.eq.s32.totalorder %s21, 0
      %p95 = por %p93, %p94
      %p96 = scmp.le.s32.totalorder 1, %s15
      %p97 = scmp.lt.s32.totalorder %s15, 3
      %p98 = pnand %p96, %p97
      %p99 = pneg %p98
      // Predicated region
      $region9: #{tpu_custom_call.1} parent=5 // pred_check
        _
      $region10: #{tpu_custom_call.1} parent=5 // pred_check_branch
        %101 = sbr.rel (%p98) target = $region12
      $region11: #{tpu_custom_call.1} parent=5 // pred_region
        %s102 = ssub.s32 %s15, 1
      $region12: #{tpu_custom_call.1} parent=5 // pred_fallthru
        _
      %p103 = scmp.lt.s32.totalorder %s15, 2
      // Predicated region
      $region13: #{tpu_custom_call.1} parent=5 // pred_check
        %p104 = pneg %p103
      $region14: #{tpu_custom_call.1} parent=5 // pred_check_branch
        %106 = sbr.rel (%p104) target = $region16
      $region15: #{tpu_custom_call.1} parent=5 // pred_region
        // Predicated region
        $region17: #{tpu_custom_call.1} parent=15 // pred_check
          %p107 = pneg %p35
        $region18: #{tpu_custom_call.1} parent=15 // pred_check_branch
          %109 = sbr.rel (%p107) target = $region20
        $region19: #{tpu_custom_call.1} parent=15 // pred_region
          %s110 = sand.u32 %s25, 1
          %s111 = scalar_lea.sflag [#allocation4], %s110
          %s112 = sand.u32 %s25, 1
          %s113 = smul.addr %s112, 64
          %s114 = scalar_lea.vmem [#allocation3], %s113
          %s115 = smul.u32 2, %s15
          %s116 = ssub.s32 3, %s115
          %p117 = scmp.lt.s32.totalorder %s116, 2
          %s118 = scalar_select %p117, %s116, 2
          %s119 = smul.u32 8, %s118
          %s120 = smul.u32 %s119, 4
          %s121 = ssub.s32 64, %s120
          %s122 = sshll.u32 %s121, 4
          %123 = vsyncadd %s111, %s122
          %p124 = scmp.ne.s32.totalorder 0, %s120
          %s125 = smul.addr %s115, 4
          %s126 = smul.addr %s125, 8
          %s127 = scalar_lea.hbm %s0, %s126
          %s128 = smul.u32 32, %s118
          %s129 = sshll.u32 %s127, 4
          %s130 = int_to_ptr.hbm [resolvable:$true] %s129
          %s131 = sshll.u32 %s114, 4
          %s132 = int_to_ptr.vmem [resolvable:$true] %s131
          %s133 = sshll.u32 %s128, 4
          %137 = dma.hbm_to_vmem [thread:$0]  (%p124), %s130, %s133, %s132, %s111, 512, 512, 32
        $region20: #{tpu_custom_call.1} parent=15 // pred_fallthru
          _
        // Predicated region
        $region21: #{tpu_custom_call.1} parent=15 // pred_check
          %p138 = pneg %p61
        $region22: #{tpu_custom_call.1} parent=15 // pred_check_branch
          %140 = sbr.rel (%p138) target = $region24
        $region23: #{tpu_custom_call.1} parent=15 // pred_region
          %s141 = sand.u32 %s51, 1
          %s142 = scalar_lea.sflag [#allocation7], %s141
          %s143 = sand.u32 %s51, 1
          %s144 = smul.addr %s143, 64
          %s145 = scalar_lea.vmem [#allocation6], %s144
          %s146 = smul.u32 2, %s15
          %s147 = ssub.s32 3, %s146
          %p148 = scmp.lt.s32.totalorder %s147, 2
          %s149 = scalar_select %p148, %s147, 2
          %s150 = smul.u32 8, %s149
          %s151 = smul.u32 %s150, 4
          %s152 = ssub.s32 64, %s151
          %s153 = sshll.u32 %s152, 4
          %154 = vsyncadd %s142, %s153
          %p155 = scmp.ne.s32.totalorder 0, %s151
          %s156 = smul.addr %s146, 4
          %s157 = smul.addr %s156, 8
          %s158 = scalar_lea.hbm %s1, %s157
          %s159 = smul.u32 32, %s149
          %s160 = sshll.u32 %s158, 4
          %s161 = int_to_ptr.hbm [resolvable:$true] %s160
          %s162 = sshll.u32 %s145, 4
          %s163 = int_to_ptr.vmem [resolvable:$true] %s162
          %s164 = sshll.u32 %s159, 4
          %168 = dma.hbm_to_vmem [thread:$0]  (%p155), %s161, %s164, %s163, %s142, 512, 512, 32
        $region24: #{tpu_custom_call.1} parent=15 // pred_fallthru
          _
      $region16: #{tpu_custom_call.1} parent=5 // pred_fallthru
        _
      %p169 = scmp.le.s32.totalorder 1, %s15
      %p170 = scmp.lt.s32.totalorder %s15, 3
      %p171 = pnand %p169, %p170
      %p172 = pneg %p171
      // Predicated region
      $region25: #{tpu_custom_call.1} parent=5 // pred_check
        _
      $region26: #{tpu_custom_call.1} parent=5 // pred_check_branch
        %174 = sbr.rel (%p171) target = $region28
      $region27: #{tpu_custom_call.1} parent=5 // pred_region
        %s175 = ssub.s32 %s15, 1
        %s176 = sand.u32 %s28, 1
        %s177 = scalar_lea.sflag [#allocation4], %s176
        %s178 = sand.u32 %s28, 1
        %s179 = smul.addr %s178, 64
        %s180 = scalar_lea.vmem [#allocation3], %s179
        // Predicated region
        $region29: #{tpu_custom_call.1} parent=27 // pred_check
          %p181 = pneg %p41
        $region30: #{tpu_custom_call.1} parent=27 // pred_check_branch
          %183 = sbr.rel (%p181) target = $region32
        $region31: #{tpu_custom_call.1} parent=27 // pred_region
          %185 = dma.done %s177, 1024
        $region32: #{tpu_custom_call.1} parent=27 // pred_fallthru
          _
        %s186 = sand.u32 %s54, 1
        %s187 = scalar_lea.sflag [#allocation7], %s186
        %s188 = sand.u32 %s54, 1
        %s189 = smul.addr %s188, 64
        %s190 = scalar_lea.vmem [#allocation6], %s189
        // Predicated region
        $region33: #{tpu_custom_call.1} parent=27 // pred_check
          %p191 = pneg %p67
        $region34: #{tpu_custom_call.1} parent=27 // pred_check_branch
          %193 = sbr.rel (%p191) target = $region36
        $region35: #{tpu_custom_call.1} parent=27 // pred_region
          %195 = dma.done %s187, 1024
        $region36: #{tpu_custom_call.1} parent=27 // pred_fallthru
          _
        %s196 = sand.u32 %s28, 1
        %s197 = scalar_lea.sflag [#allocation4], %s196
        %s198 = sand.u32 %s28, 1
        %s199 = smul.addr %s198, 64
        %s200 = scalar_lea.vmem [#allocation3], %s199
        %p201 = pneg %p41
        %p202 = pneg %p38
        %s203 = sand.u32 %s54, 1
        %s204 = scalar_lea.sflag [#allocation7], %s203
        %s205 = sand.u32 %s54, 1
        %s206 = smul.addr %s205, 64
        %s207 = scalar_lea.vmem [#allocation6], %s206
        %p208 = pneg %p67
        %p209 = pneg %p64
        %p210 = pneg %p88
        %p211 = pneg %p85
        %s212 = smul.u32 2, %s20
        %s213 = ssub.s32 3, %s212
        %p214 = scmp.lt.s32.totalorder %s213, 2
        %s215 = scalar_select %p214, %s213, 2
        %s216 = smul.u32 8, %s215
        %s217 = smul.u32 %s216, 4
        %s218 = smul.u32 2, %s20
        %s219 = ssub.s32 3, %s218
        %p220 = scmp.lt.s32.totalorder %s219, 2
        %s221 = scalar_select %p220, %s219, 2
        %s222 = smul.u32 8, %s221
        %s223 = smul.u32 %s222, 4
        %p224 = scmp.eq.s32.totalorder %s20, 0
        // Predicated region
        $region37: #{tpu_custom_call.1} parent=27 // pred_check
          %p225 = pneg %p224
        $region38: #{tpu_custom_call.1} parent=27 // pred_check_branch
          %227 = sbr.rel (%p225) target = $region40
        $region39: #{tpu_custom_call.1} parent=27 // pred_region
          %228 = vst [vmem:[#allocation2] sm:$0xff] 0.0
          %229 = vst [vmem:[#allocation2 + $0x8] sm:$0xff] 0.0
          %230 = vst [vmem:[#allocation2 + $0x10] sm:$0xff] 0.0
          %231 = vst [vmem:[#allocation2 + $0x18] sm:$0xff] 0.0
        $region40: #{tpu_custom_call.1} parent=27 // pred_fallthru
          _
        %p232 = scmp.lt.s32.totalorder %s20, 1
        // Predicated region
        $region41: #{tpu_custom_call.1} parent=27 // pred_check
          %p233 = pneg %p232
        $region42: #{tpu_custom_call.1} parent=27 // pred_check_branch
          %235 = sbr.rel (%p233) target = $region44
        $region43: #{tpu_custom_call.1} parent=27 // pred_region
          %v236 = vld [vmem:[%s180] sm:$0xff]
          %v237 = vld [vmem:[%s180 + $0x8] sm:$0xff]
          %v238 = vld [vmem:[%s180 + $0x10] sm:$0xff]
          %v239 = vld [vmem:[%s180 + $0x18] sm:$0xff]
          %v240 = vld [vmem:[%s180 + $0x20] sm:$0xff]
          %v241 = vld [vmem:[%s180 + $0x28] sm:$0xff]
          %v242 = vld [vmem:[%s180 + $0x30] sm:$0xff]
          %v243 = vld [vmem:[%s180 + $0x38] sm:$0xff]
          %v244 = vld [vmem:[%s190] sm:$0xff]
          %v245 = vld [vmem:[%s190 + $0x8] sm:$0xff]
          %v246 = vld [vmem:[%s190 + $0x10] sm:$0xff]
          %v247 = vld [vmem:[%s190 + $0x18] sm:$0xff]
          %v248 = vld [vmem:[%s190 + $0x20] sm:$0xff]
          %v249 = vld [vmem:[%s190 + $0x28] sm:$0xff]
          %v250 = vld [vmem:[%s190 + $0x30] sm:$0xff]
          %v251 = vld [vmem:[%s190 + $0x38] sm:$0xff]
          %v252 = vmul.f32 %v244, 0.8
          %v253 = vmul.f32 %v245, 0.8
          %v254 = vmul.f32 %v246, 0.8
          %v255 = vmul.f32 %v247, 0.8
          %v256 = vmul.f32 %v248, 0.8
          %v257 = vmul.f32 %v249, 0.8
          %v258 = vmul.f32 %v250, 0.8
          %v259 = vmul.f32 %v251, 0.8
          %v260 = vadd.f32 %v252, 0.1
          %v261 = vadd.f32 %v253, 0.1
          %v262 = vadd.f32 %v254, 0.1
          %v263 = vadd.f32 %v255, 0.1
          %v264 = vadd.f32 %v256, 0.1
          %v265 = vadd.f32 %v257, 0.1
          %v266 = vadd.f32 %v258, 0.1
          %v267 = vadd.f32 %v259, 0.1
          %v268 = vmax.f32 %v236, 0.0
          %v269 = vmax.f32 %v237, 0.0
          %v270 = vmax.f32 %v238, 0.0
          %v271 = vmax.f32 %v239, 0.0
          %v272 = vmax.f32 %v240, 0.0
          %v273 = vmax.f32 %v241, 0.0
          %v274 = vmax.f32 %v242, 0.0
          %v275 = vmax.f32 %v243, 0.0
          %v276 = vmul.f32 %v236, %v260
          %v277 = vmul.f32 %v237, %v261
          %v278 = vmul.f32 %v238, %v262
          %v279 = vmul.f32 %v239, %v263
          %v280 = vmul.f32 %v240, %v264
          %v281 = vmul.f32 %v241, %v265
          %v282 = vmul.f32 %v242, %v266
          %v283 = vmul.f32 %v243, %v267
          %v284 = vsub.f32 %v268, %v276
          %v285 = vsub.f32 %v269, %v277
          %v286 = vsub.f32 %v270, %v278
          %v287 = vsub.f32 %v271, %v279
          %v288 = vsub.f32 %v272, %v280
          %v289 = vsub.f32 %v273, %v281
          %v290 = vsub.f32 %v274, %v282
          %v291 = vsub.f32 %v275, %v283
          %v292 = vand.u32 2147483647, %v236
          %v293 = vand.u32 2147483647, %v237
          %v294 = vand.u32 2147483647, %v238
          %v295 = vand.u32 2147483647, %v239
          %v296 = vand.u32 2147483647, %v240
          %v297 = vand.u32 2147483647, %v241
          %v298 = vand.u32 2147483647, %v242
          %v299 = vand.u32 2147483647, %v243
          %v300 = vsub.f32 0.0, %v292
          %v301 = vsub.f32 0.0, %v293
          %v302 = vsub.f32 0.0, %v294
          %v303 = vsub.f32 0.0, %v295
          %v304 = vsub.f32 0.0, %v296
          %v305 = vsub.f32 0.0, %v297
          %v306 = vsub.f32 0.0, %v298
          %v307 = vsub.f32 0.0, %v299
          %v308 = vmul.f32 %v300, 1.442695
          %v309 = vpow.pop %v308
          %v310 = vmul.f32 %v301, 1.442695
          %v311 = vpow.pop %v310
          %v312 = vmul.f32 %v302, 1.442695
          %v313 = vpow.pop %v312
          %v314 = vmul.f32 %v303, 1.442695
          %v315 = vpow.pop %v314
          %v316 = vmul.f32 %v304, 1.442695
          %v317 = vpow.pop %v316
          %v318 = vmul.f32 %v305, 1.442695
          %v319 = vpow.pop %v318
          %v320 = vmul.f32 %v306, 1.442695
          %v321 = vpow.pop %v320
          %v322 = vmul.f32 %v307, 1.442695
          %v323 = vpow.pop %v322
          %v324 = vadd.f32 %v309, 1.0
          %v325 = vlog2.pop %v324
          %v326 = vmul.f32 %v325, 0.6931472
          %v327 = vmul.f32 -0.5, %v309
          %v328 = vadd.f32 %v327, 1.0
          %v329 = vmul.f32 %v328, %v309
          %v330 = vand.u32 2147483647, %v309
          %vm331 = vcmp.lt.f32.partialorder %v330, 0.0004427343
          %v332 = vsel %vm331, %v329, %v326
          %v333 = vadd.f32 %v311, 1.0
          %v334 = vlog2.pop %v333
          %v335 = vmul.f32 %v334, 0.6931472
          %v336 = vmul.f32 -0.5, %v311
          %v337 = vadd.f32 %v336, 1.0
          %v338 = vmul.f32 %v337, %v311
          %v339 = vand.u32 2147483647, %v311
          %vm340 = vcmp.lt.f32.partialorder %v339, 0.0004427343
          %v341 = vsel %vm340, %v338, %v335
          %v342 = vadd.f32 %v313, 1.0
          %v343 = vlog2.pop %v342
          %v344 = vmul.f32 %v343, 0.6931472
          %v345 = vmul.f32 -0.5, %v313
          %v346 = vadd.f32 %v345, 1.0
          %v347 = vmul.f32 %v346, %v313
          %v348 = vand.u32 2147483647, %v313
          %vm349 = vcmp.lt.f32.partialorder %v348, 0.0004427343
          %v350 = vsel %vm349, %v347, %v344
          %v351 = vadd.f32 %v315, 1.0
          %v352 = vlog2.pop %v351
          %v353 = vmul.f32 %v352, 0.6931472
          %v354 = vmul.f32 -0.5, %v315
          %v355 = vadd.f32 %v354, 1.0
          %v356 = vmul.f32 %v355, %v315
          %v357 = vand.u32 2147483647, %v315
          %vm358 = vcmp.lt.f32.partialorder %v357, 0.0004427343
          %v359 = vsel %vm358, %v356, %v353
          %v360 = vadd.f32 %v317, 1.0
          %v361 = vlog2.pop %v360
          %v362 = vmul.f32 %v361, 0.6931472
          %v363 = vmul.f32 -0.5, %v317
          %v364 = vadd.f32 %v363, 1.0
          %v365 = vmul.f32 %v364, %v317
          %v366 = vand.u32 2147483647, %v317
          %vm367 = vcmp.lt.f32.partialorder %v366, 0.0004427343
          %v368 = vsel %vm367, %v365, %v362
          %v369 = vadd.f32 %v319, 1.0
          %v370 = vlog2.pop %v369
          %v371 = vmul.f32 %v370, 0.6931472
          %v372 = vmul.f32 -0.5, %v319
          %v373 = vadd.f32 %v372, 1.0
          %v374 = vmul.f32 %v373, %v319
          %v375 = vand.u32 2147483647, %v319
          %vm376 = vcmp.lt.f32.partialorder %v375, 0.0004427343
          %v377 = vsel %vm376, %v374, %v371
          %v378 = vadd.f32 %v321, 1.0
          %v379 = vlog2.pop %v378
          %v380 = vmul.f32 %v379, 0.6931472
          %v381 = vmul.f32 -0.5, %v321
          %v382 = vadd.f32 %v381, 1.0
          %v383 = vmul.f32 %v382, %v321
          %v384 = vand.u32 2147483647, %v321
          %vm385 = vcmp.lt.f32.partialorder %v384, 0.0004427343
          %v386 = vsel %vm385, %v383, %v380
          %v387 = vadd.f32 %v323, 1.0
          %v388 = vlog2.pop %v387
          %v389 = vmul.f32 %v388, 0.6931472
          %v390 = vmul.f32 -0.5, %v323
          %v391 = vadd.f32 %v390, 1.0
          %v392 = vmul.f32 %v391, %v323
          %v393 = vand.u32 2147483647, %v323
          %vm394 = vcmp.lt.f32.partialorder %v393, 0.0004427343
          %v395 = vsel %vm394, %v392, %v389
          %v396 = vadd.f32 %v284, %v332
          %v397 = vadd.f32 %v285, %v341
          %v398 = vadd.f32 %v286, %v350
          %v399 = vadd.f32 %v287, %v359
          %v400 = vadd.f32 %v288, %v368
          %v401 = vadd.f32 %v289, %v377
          %v402 = vadd.f32 %v290, %v386
          %v403 = vadd.f32 %v291, %v395
          %v404 = vld [vmem:[#allocation2] sm:$0xff]
          %v405 = vld [vmem:[#allocation2 + $0x8] sm:$0xff]
          %v406 = vld [vmem:[#allocation2 + $0x10] sm:$0xff]
          %v407 = vld [vmem:[#allocation2 + $0x18] sm:$0xff]
          %v408 = vadd.f32 %v396, %v400
          %v409 = vadd.f32 %v397, %v401
          %v410 = vadd.f32 %v398, %v402
          %v411 = vadd.f32 %v399, %v403
          %v412 = vadd.f32 %v404, %v408
          %v413 = vadd.f32 %v405, %v409
          %v414 = vadd.f32 %v406, %v410
          %v415 = vadd.f32 %v407, %v411
          %416 = vst [vmem:[#allocation2] sm:$0xff] %v412
          %417 = vst [vmem:[#allocation2 + $0x8] sm:$0xff] %v413
          %418 = vst [vmem:[#allocation2 + $0x10] sm:$0xff] %v414
          %419 = vst [vmem:[#allocation2 + $0x18] sm:$0xff] %v415
        $region44: #{tpu_custom_call.1} parent=27 // pred_fallthru
          _
        %p420 = scmp.eq.s32.totalorder %s20, 1
        // Predicated region
        $region45: #{tpu_custom_call.1} parent=27 // pred_check
          %p421 = pneg %p420
        $region46: #{tpu_custom_call.1} parent=27 // pred_check_branch
          %423 = sbr.rel (%p421) target = $region48
        $region47: #{tpu_custom_call.1} parent=27 // pred_region
          %v424 = vld [vmem:[%s180] sm:$0xff]
          %v425 = vld [vmem:[%s180 + $0x8] sm:$0xff]
          %v426 = vld [vmem:[%s180 + $0x10] sm:$0xff]
          %v427 = vld [vmem:[%s180 + $0x18] sm:$0xff]
          %v428 = vld [vmem:[%s190] sm:$0xff]
          %v429 = vld [vmem:[%s190 + $0x8] sm:$0xff]
          %v430 = vld [vmem:[%s190 + $0x10] sm:$0xff]
          %v431 = vld [vmem:[%s190 + $0x18] sm:$0xff]
          %v432 = vmul.f32 %v428, 0.8
          %v433 = vmul.f32 %v429, 0.8
          %v434 = vmul.f32 %v430, 0.8
          %v435 = vmul.f32 %v431, 0.8
          %v436 = vadd.f32 %v432, 0.1
          %v437 = vadd.f32 %v433, 0.1
          %v438 = vadd.f32 %v434, 0.1
          %v439 = vadd.f32 %v435, 0.1
          %v440 = vmax.f32 %v424, 0.0
          %v441 = vmax.f32 %v425, 0.0
          %v442 = vmax.f32 %v426, 0.0
          %v443 = vmax.f32 %v427, 0.0
          %v444 = vmul.f32 %v424, %v436
          %v445 = vmul.f32 %v425, %v437
          %v446 = vmul.f32 %v426, %v438
          %v447 = vmul.f32 %v427, %v439
          %v448 = vsub.f32 %v440, %v444
          %v449 = vsub.f32 %v441, %v445
          %v450 = vsub.f32 %v442, %v446
          %v451 = vsub.f32 %v443, %v447
          %v452 = vand.u32 2147483647, %v424
          %v453 = vand.u32 2147483647, %v425
          %v454 = vand.u32 2147483647, %v426
          %v455 = vand.u32 2147483647, %v427
          %v456 = vsub.f32 0.0, %v452
          %v457 = vsub.f32 0.0, %v453
          %v458 = vsub.f32 0.0, %v454
          %v459 = vsub.f32 0.0, %v455
          %v460 = vmul.f32 %v456, 1.442695
          %v461 = vpow.pop %v460
          %v462 = vmul.f32 %v457, 1.442695
          %v463 = vpow.pop %v462
          %v464 = vmul.f32 %v458, 1.442695
          %v465 = vpow.pop %v464
          %v466 = vmul.f32 %v459, 1.442695
          %v467 = vpow.pop %v466
          %v468 = vadd.f32 %v461, 1.0
          %v469 = vlog2.pop %v468
          %v470 = vmul.f32 %v469, 0.6931472
          %v471 = vmul.f32 -0.5, %v461
          %v472 = vadd.f32 %v471, 1.0
          %v473 = vmul.f32 %v472, %v461
          %v474 = vand.u32 2147483647, %v461
          %vm475 = vcmp.lt.f32.partialorder %v474, 0.0004427343
          %v476 = vsel %vm475, %v473, %v470
          %v477 = vadd.f32 %v463, 1.0
          %v478 = vlog2.pop %v477
          %v479 = vmul.f32 %v478, 0.6931472
          %v480 = vmul.f32 -0.5, %v463
          %v481 = vadd.f32 %v480, 1.0
          %v482 = vmul.f32 %v481, %v463
          %v483 = vand.u32 2147483647, %v463
          %vm484 = vcmp.lt.f32.partialorder %v483, 0.0004427343
          %v485 = vsel %vm484, %v482, %v479
          %v486 = vadd.f32 %v465, 1.0
          %v487 = vlog2.pop %v486
          %v488 = vmul.f32 %v487, 0.6931472
          %v489 = vmul.f32 -0.5, %v465
          %v490 = vadd.f32 %v489, 1.0
          %v491 = vmul.f32 %v490, %v465
          %v492 = vand.u32 2147483647, %v465
          %vm493 = vcmp.lt.f32.partialorder %v492, 0.0004427343
          %v494 = vsel %vm493, %v491, %v488
          %v495 = vadd.f32 %v467, 1.0
          %v496 = vlog2.pop %v495
          %v497 = vmul.f32 %v496, 0.6931472
          %v498 = vmul.f32 -0.5, %v467
          %v499 = vadd.f32 %v498, 1.0
          %v500 = vmul.f32 %v499, %v467
          %v501 = vand.u32 2147483647, %v467
          %vm502 = vcmp.lt.f32.partialorder %v501, 0.0004427343
          %v503 = vsel %vm502, %v500, %v497
          %v504 = vadd.f32 %v448, %v476
          %v505 = vadd.f32 %v449, %v485
          %v506 = vadd.f32 %v450, %v494
          %v507 = vadd.f32 %v451, %v503
          %v508 = vlaneseq
          %v509 = vshrl.u32 %v508, 7
          %vm510 = vcmp.lt.s32.totalorder %v509, 3
          %v511 = vsel %vm510, %v504, 0.0
          %v512 = vsel %vm510, %v505, 0.0
          %v513 = vsel %vm510, %v506, 0.0
          %v514 = vsel %vm510, %v507, 0.0
          %v515 = vld [vmem:[#allocation2] sm:$0xff]
          %v516 = vld [vmem:[#allocation2 + $0x8] sm:$0xff]
          %v517 = vld [vmem:[#allocation2 + $0x10] sm:$0xff]
          %v518 = vld [vmem:[#allocation2 + $0x18] sm:$0xff]
          %v519 = vadd.f32 %v511, 0.0
          %v520 = vadd.f32 %v512, 0.0
          %v521 = vadd.f32 %v513, 0.0
          %v522 = vadd.f32 %v514, 0.0
          %v523 = vadd.f32 %v515, %v519
          %v524 = vadd.f32 %v516, %v520
          %v525 = vadd.f32 %v517, %v521
          %v526 = vadd.f32 %v518, %v522
          %527 = vst [vmem:[#allocation2] sm:$0xff] %v523
          %528 = vst [vmem:[#allocation2 + $0x8] sm:$0xff] %v524
          %529 = vst [vmem:[#allocation2 + $0x10] sm:$0xff] %v525
          %530 = vst [vmem:[#allocation2 + $0x18] sm:$0xff] %v526
          %v531 = vld [vmem:[#allocation2] sm:$0xff]
          %v532 = vld [vmem:[#allocation2 + $0x8] sm:$0xff]
          %v533 = vld [vmem:[#allocation2 + $0x10] sm:$0xff]
          %v534 = vld [vmem:[#allocation2 + $0x18] sm:$0xff]
          %v535 = vadd.f32 %v531, %v532
          %v536 = vadd.f32 %v535, %v533
          %v537 = vadd.f32 %v536, %v534
          %538 = vadd.xlane.f32.xlu0 %v537
          %v539 = vpop.xlane.xlu0 %538
          %v540 = vrot.slane %v539, 4
          %v541 = vadd.f32 %v539, %v540
          %v542 = vrot.slane %v541, 2
          %v543 = vadd.f32 %v541, %v542
          %v544 = vrot.slane %v543, 1
          %v545 = vadd.f32 %v543, %v544
          %s546 = vtos %v545
          %s547 = smul.f32 %s546, 0.00010416667
          %s548 = scalar_lea.smem [#allocation8], 0
          %549 = sst [smem:[%s548]] %s547
        $region48: #{tpu_custom_call.1} parent=27 // pred_fallthru
          _
        // Predicated region
        $region49: #{tpu_custom_call.1} parent=27 // pred_check
          %p550 = pneg %p85
        $region50: #{tpu_custom_call.1} parent=27 // pred_check_branch
          %552 = sbr.rel (%p550) target = $region52
        $region51: #{tpu_custom_call.1} parent=27 // pred_region
          %554 = vsyncadd [#allocation5], 0
          %s556 = sshll.u32 %s2, 4
          %s557 = int_to_ptr.hbm [resolvable:$true] %s556
          %559 = dma.smem_to_hbm [#allocation8], 16, %s557, [#allocation5]
        $region52: #{tpu_custom_call.1} parent=27 // pred_fallthru
          _
        // Predicated region
        $region53: #{tpu_custom_call.1} parent=27 // pred_check
          %p560 = pneg %p85
        $region54: #{tpu_custom_call.1} parent=27 // pred_check_branch
          %562 = sbr.rel (%p560) target = $region56
        $region55: #{tpu_custom_call.1} parent=27 // pred_region
          %564 = dma.done [#allocation5], 16
        $region56: #{tpu_custom_call.1} parent=27 // pred_fallthru
          _
        %565 = sfence
      $region28: #{tpu_custom_call.1} parent=5 // pred_fallthru
        _
      %p566 = scmp.le.s32.totalorder 2, %s15
      // Predicated region
      $region57: #{tpu_custom_call.1} parent=5 // pred_check
        %p567 = pneg %p566
      $region58: #{tpu_custom_call.1} parent=5 // pred_check_branch
        %569 = sbr.rel (%p567) target = $region60
      $region59: #{tpu_custom_call.1} parent=5 // pred_region
        %s570 = ssub.s32 %s15, 2
      $region60: #{tpu_custom_call.1} parent=5 // pred_fallthru
        _
    $region6: #{tpu_custom_call.1} parent=1 // loop_footer
      %s19 = sadd.s32 1, %s15
    $region7: #{tpu_custom_call.1} parent=1 // loop_footer_branch
      %14 = sbr.rel target = $region3
    $region8: #{tpu_custom_call.1} parent=1 // loop_exit
      _
    %571 = vsyncpa [#allocation4], 1
    %s572 = scalar_lea.sflag [#allocation4], 1
    %573 = vsyncpa %s572, 1
    %574 = vsyncpa [#allocation7], 1
    %s575 = scalar_lea.sflag [#allocation7], 1
    %576 = vsyncpa %s575, 1
    %577 = vsyncpa [#allocation5], 1
    %s578 = scalar_lea.sflag [#allocation5], 1
    %579 = vsyncpa %s578, 1

</llo_original>
